<compile_context>
chip_gen: v7x
topology: tpu7x:2x2x1
jax: 0.10.0
libtpu: 0.0.40
codegen_flags: <defaults>
</compile_context>

<pallas_src>
import math

import jax
import jax.numpy as jnp
from jax.experimental import pallas as pl
from jax.experimental.pallas import tpu as pltpu  # noqa: F401  (TPU backend)

# Model config (small, consistent with the module's constraints)
BATCH = 2
SEQ = 8
MODEL_DIM = 32
NUM_HEADS = 4
DIMS_PER_HEAD = MODEL_DIM // NUM_HEADS  # 8

_MASK_BIAS = -1e30  # additive logit mask; exp underflows to exactly 0 in f32


def _bert_self_attn_kernel(data_ref, params_ref, o_ref):
    B, S, H, D, Dh = BATCH, SEQ, NUM_HEADS, MODEL_DIM, DIMS_PER_HEAD
    N = B * S

    data = data_ref[...].astype(jnp.float32)        # (N, D + N)
    params = params_ref[...].astype(jnp.float32)    # (D + 1, 4D)

    # Static value slices of the packed slabs (no extra DMAs, no 3-D padding).
    x = data[:, :D]                                 # (N, D)
    mask_bias = data[:, D:D + N]                    # (N, N) additive 0 / -1e30

    w_in = params[:D, :3 * D]                       # (D, 3D)
    w_out = params[:D, 3 * D:]                      # (D, D)
    b_in = params[D:D + 1, :3 * D]                  # (1, 3D)
    b_out = params[D:D + 1, 3 * D:]                 # (1, D)

    # Fused QKV projection: one MXU matmul, N=96 output lanes (75% fill).
    proj = jnp.dot(x, w_in, preferred_element_type=jnp.float32) + b_in  # (N, 3D)

    scale = 1.0 / math.sqrt(Dh)

    # Per-head attention over the full B*S key axis; the additive mask removes
    # cross-batch keys (block-diagonal) and padded keys, so results match the
    # per-batch computation exactly (masked probabilities underflow to 0).
    ctx_heads = []
    for h in range(H):
        q = proj[:, 0 * D + h * Dh:0 * D + (h + 1) * Dh]   # (N, Dh)
        k = proj[:, 1 * D + h * Dh:1 * D + (h + 1) * Dh]   # (N, Dh)
        v = proj[:, 2 * D + h * Dh:2 * D + (h + 1) * Dh]   # (N, Dh)

        scores = jnp.einsum("qd,kd->qk", q, k,
                            preferred_element_type=jnp.float32)
        scores = scores * scale + mask_bias                # (N, N)

        # Numerically stable softmax; normalize via EUP approximate reciprocal
        # (free slot) instead of a VALU divide.
        m = jnp.max(scores, axis=-1, keepdims=True)
        e = jnp.exp(scores - m)
        denom = jnp.sum(e, axis=-1, keepdims=True)
        p = e * pl.reciprocal(denom, approx=True)

        # TODO(synk): attention dropout skipped (eval-mode semantics).
        ctx_heads.append(jnp.dot(p, v, preferred_element_type=jnp.float32))

    # Head merge (cheap lane repack) + output projection as ONE dense matmul.
    ctx = jnp.concatenate(ctx_heads, axis=-1)              # (N, D)
    out = jnp.dot(ctx, w_out, preferred_element_type=jnp.float32) + b_out

    # Single full-block store (one masked vst instead of two per-batch stores).
    o_ref[...] = out.astype(o_ref.dtype)


def bert_self_attention(x, attn_mask, w_in, b_in, w_out, b_out):
    """x: (B, S, D) float32; attn_mask: (B, S), 1 = attend, 0 = masked.

    Weights stored as (in, out), i.e. transpose of torch.nn.Linear.weight.
    """
    B, S, D = x.shape
    N = B * S

    # ---- wrapper-side layout plumbing (free for XLA, keeps kernel dense) ----
    x_flat = x.reshape(N, D)

    # Combined additive logit mask: block-diagonal over batches AND key mask.
    keep = attn_mask > 0                                             # (B, S)
    same_batch = jnp.eye(B, dtype=bool)[:, None, :, None]            # (B,1,B,1)
    keep_full = jnp.broadcast_to(same_batch & keep[None, None, :, :],
                                 (B, S, B, S)).reshape(N, N)
    mask_bias = jnp.where(keep_full, 0.0, _MASK_BIAS).astype(x.dtype)

    # Slab 1 (activations): [x | mask_bias] -> (N, D + N) = (16, 48)
    data = jnp.concatenate([x_flat, mask_bias], axis=1)

    # Slab 2 (params): [[w_in | w_out], [b_in | b_out]] -> (D+1, 4D) = (33, 128)
    w_cat = jnp.concatenate([w_in, w_out], axis=1)                   # (D, 4D)
    b_cat = jnp.concatenate([b_in, b_out], axis=0)[None, :]          # (1, 4D)
    params = jnp.concatenate([w_cat, b_cat], axis=0)                 # (D+1, 4D)

    # Single invocation, no grid: everything fits trivially in VMEM; 2 DMAs in,
    # 1 DMA out.
    out_flat = pl.pallas_call(
        _bert_self_attn_kernel,
        out_shape=jax.ShapeDtypeStruct((N, D), x.dtype),
    )(data, params)
    return out_flat.reshape(B, S, D)


def _reference(x, attn_mask, w_in, b_in, w_out, b_out):
    """Pure-JAX replica of the PyTorch forward for a correctness check."""
    B, S, D = x.shape
    H, Dh = NUM_HEADS, DIMS_PER_HEAD
    proj = x @ w_in + b_in
    q, k, v = jnp.split(proj, 3, axis=-1)

    def split_heads(t):
        return t.reshape(B, S, H, Dh).transpose(0, 2, 1, 3)

    q, k, v = split_heads(q), split_heads(k), split_heads(v)
    scores = jnp.einsum("bhqd,bhkd->bhqk", q, k) / math.sqrt(Dh)
    keep = attn_mask[:, None, None, :] > 0
    scores = jnp.where(keep, scores, jnp.finfo(jnp.float32).min)
    w = jax.nn.softmax(scores, axis=-1)
    attn = jnp.einsum("bhqk,bhkd->bhqd", w, v)
    attn = attn.transpose(0, 2, 1, 3).reshape(B, S, D)
    return attn @ w_out + b_out


if __name__ == "__main__":
    key = jax.random.PRNGKey(0)
    kx, kwi, kbi, kwo, kbo = jax.random.split(key, 5)

    x = jax.random.normal(kx, (BATCH, SEQ, MODEL_DIM), dtype=jnp.float32)

    # Deterministic parameter init (shapes from the module's __init__).
    lim = 1.0 / math.sqrt(MODEL_DIM)
    w_in = jax.random.uniform(kwi, (MODEL_DIM, 3 * MODEL_DIM),
                              minval=-lim, maxval=lim, dtype=jnp.float32)
    b_in = jax.random.uniform(kbi, (3 * MODEL_DIM,),
                              minval=-lim, maxval=lim, dtype=jnp.float32)
    w_out = jax.random.uniform(kwo, (MODEL_DIM, MODEL_DIM),
                               minval=-lim, maxval=lim, dtype=jnp.float32)
    b_out = jax.random.uniform(kbo, (MODEL_DIM,),
                               minval=-lim, maxval=lim, dtype=jnp.float32)

    # attn_mask: 1 = attend, 0 = padding. Mask out the last two keys of batch 1.
    attn_mask = jnp.ones((BATCH, SEQ), dtype=jnp.float32)
    attn_mask = attn_mask.at[1, SEQ - 2:].set(0.0)

    out = bert_self_attention(x, attn_mask, w_in, b_in, w_out, b_out)
    out = jax.block_until_ready(out)

    ref = _reference(x, attn_mask, w_in, b_in, w_out, b_out)
    # Tolerance accounts for the approximate (EUP) reciprocal in the softmax.
    assert jnp.allclose(out, ref, atol=5e-3, rtol=5e-3), "mismatch vs reference"

    print("KERNEL_OK")
</pallas_src>

<mosaic_0001>
module attributes {stable_mosaic.version = 11 : i64} {
  func.func @_bert_self_attn_kernel(%arg0: memref<16x48xf32, #tpu.memory_space<vmem>>, %arg1: memref<33x128xf32, #tpu.memory_space<vmem>>, %arg2: memref<16x32xf32, #tpu.memory_space<vmem>>) attributes {dimension_semantics = [], scalar_prefetch = 0 : i64, scratch_operands = 0 : i64, tpu.core_type = #tpu.core_type<tc>} {
    %c0 = arith.constant 0 : index
    %c0_0 = arith.constant 0 : index
    %0 = vector.load %arg0[%c0, %c0_0] : memref<16x48xf32, #tpu.memory_space<vmem>>, vector<16x48xf32>
    %c0_1 = arith.constant 0 : index
    %c0_2 = arith.constant 0 : index
    %1 = vector.load %arg1[%c0_1, %c0_2] : memref<33x128xf32, #tpu.memory_space<vmem>>, vector<33x128xf32>
    %2 = vector.extract_strided_slice %0 {offsets = [0, 0], sizes = [16, 32], strides = [1, 1]} : vector<16x48xf32> to vector<16x32xf32>
    %3 = vector.extract_strided_slice %0 {offsets = [0, 32], sizes = [16, 16], strides = [1, 1]} : vector<16x48xf32> to vector<16x16xf32>
    %4 = vector.extract_strided_slice %1 {offsets = [0, 0], sizes = [32, 96], strides = [1, 1]} : vector<33x128xf32> to vector<32x96xf32>
    %5 = vector.extract_strided_slice %1 {offsets = [0, 96], sizes = [32, 32], strides = [1, 1]} : vector<33x128xf32> to vector<32x32xf32>
    %6 = vector.extract_strided_slice %1 {offsets = [32, 0], sizes = [1, 96], strides = [1, 1]} : vector<33x128xf32> to vector<1x96xf32>
    %7 = vector.extract_strided_slice %1 {offsets = [32, 96], sizes = [1, 32], strides = [1, 1]} : vector<33x128xf32> to vector<1x32xf32>
    %cst = arith.constant dense<0.000000e+00> : vector<16x96xf32>
    %8 = tpu.matmul %2, %4, %cst {dimension_numbers = #tpu.dot_dimension_numbers<[1], [0], [0], [1], [0, 0, 1, 1], [], []>} : vector<16x32xf32>, vector<32x96xf32>, vector<16x96xf32> -> vector<16x96xf32>
    %9 = vector.broadcast %6 : vector<1x96xf32> to vector<16x96xf32>
    %10 = arith.addf %8, %9 : vector<16x96xf32>
    %11 = vector.extract_strided_slice %10 {offsets = [0, 0], sizes = [16, 8], strides = [1, 1]} : vector<16x96xf32> to vector<16x8xf32>
    %12 = vector.extract_strided_slice %10 {offsets = [0, 32], sizes = [16, 8], strides = [1, 1]} : vector<16x96xf32> to vector<16x8xf32>
    %13 = vector.extract_strided_slice %10 {offsets = [0, 64], sizes = [16, 8], strides = [1, 1]} : vector<16x96xf32> to vector<16x8xf32>
    "tpu.trace_start"() <{level = 10 : i32, message = "qd,kd->qk"}> : () -> ()
    %cst_3 = arith.constant dense<0.000000e+00> : vector<16x16xf32>
    %14 = tpu.matmul %11, %12, %cst_3 {dimension_numbers = #tpu.dot_dimension_numbers<[1], [1], [0], [0], [0, 0, 1, 0], [], []>} : vector<16x8xf32>, vector<16x8xf32>, vector<16x16xf32> -> vector<16x16xf32>
    "tpu.trace_stop"() : () -> ()
    %cst_4 = arith.constant 0.353553385 : f32
    %15 = vector.broadcast %cst_4 : f32 to vector<16x16xf32>
    %16 = arith.mulf %14, %15 : vector<16x16xf32>
    %17 = arith.addf %16, %3 : vector<16x16xf32>
    %cst_5 = arith.constant dense<0xFF800000> : vector<16xf32>
    %18 = vector.multi_reduction <maximumf>, %17, %cst_5 [1] : vector<16x16xf32> to vector<16xf32>
    %19 = vector.shape_cast %18 : vector<16xf32> to vector<16x1xf32>
    %20 = vector.broadcast %19 : vector<16x1xf32> to vector<16x16xf32>
    %21 = arith.subf %17, %20 : vector<16x16xf32>
    %22 = math.exp %21 : vector<16x16xf32>
    %cst_6 = arith.constant dense<0.000000e+00> : vector<16xf32>
    %23 = vector.multi_reduction <add>, %22, %cst_6 [1] : vector<16x16xf32> to vector<16xf32>
    %24 = vector.shape_cast %23 : vector<16xf32> to vector<16x1xf32>
    %25 = tpu.reciprocal %24 {approx = true} : vector<16x1xf32> -> vector<16x1xf32>
    %26 = vector.broadcast %25 : vector<16x1xf32> to vector<16x16xf32>
    %27 = arith.mulf %22, %26 : vector<16x16xf32>
    %cst_7 = arith.constant dense<0.000000e+00> : vector<16x8xf32>
    %28 = tpu.matmul %27, %13, %cst_7 {dimension_numbers = #tpu.dot_dimension_numbers<[1], [0], [0], [1], [0, 0, 1, 1], [], []>} : vector<16x16xf32>, vector<16x8xf32>, vector<16x8xf32> -> vector<16x8xf32>
    %29 = vector.extract_strided_slice %10 {offsets = [0, 8], sizes = [16, 8], strides = [1, 1]} : vector<16x96xf32> to vector<16x8xf32>
    %30 = vector.extract_strided_slice %10 {offsets = [0, 40], sizes = [16, 8], strides = [1, 1]} : vector<16x96xf32> to vector<16x8xf32>
    %31 = vector.extract_strided_slice %10 {offsets = [0, 72], sizes = [16, 8], strides = [1, 1]} : vector<16x96xf32> to vector<16x8xf32>
    "tpu.trace_start"() <{level = 10 : i32, message = "qd,kd->qk"}> : () -> ()
    %cst_8 = arith.constant dense<0.000000e+00> : vector<16x16xf32>
    %32 = tpu.matmul %29, %30, %cst_8 {dimension_numbers = #tpu.dot_dimension_numbers<[1], [1], [0], [0], [0, 0, 1, 0], [], []>} : vector<16x8xf32>, vector<16x8xf32>, vector<16x16xf32> -> vector<16x16xf32>
    "tpu.trace_stop"() : () -> ()
    %cst_9 = arith.constant 0.353553385 : f32
    %33 = vector.broadcast %cst_9 : f32 to vector<16x16xf32>
    %34 = arith.mulf %32, %33 : vector<16x16xf32>
    %35 = arith.addf %34, %3 : vector<16x16xf32>
    %cst_10 = arith.constant dense<0xFF800000> : vector<16xf32>
    %36 = vector.multi_reduction <maximumf>, %35, %cst_10 [1] : vector<16x16xf32> to vector<16xf32>
    %37 = vector.shape_cast %36 : vector<16xf32> to vector<16x1xf32>
    %38 = vector.broadcast %37 : vector<16x1xf32> to vector<16x16xf32>
    %39 = arith.subf %35, %38 : vector<16x16xf32>
    %40 = math.exp %39 : vector<16x16xf32>
    %cst_11 = arith.constant dense<0.000000e+00> : vector<16xf32>
    %41 = vector.multi_reduction <add>, %40, %cst_11 [1] : vector<16x16xf32> to vector<16xf32>
    %42 = vector.shape_cast %41 : vector<16xf32> to vector<16x1xf32>
    %43 = tpu.reciprocal %42 {approx = true} : vector<16x1xf32> -> vector<16x1xf32>
    %44 = vector.broadcast %43 : vector<16x1xf32> to vector<16x16xf32>
    %45 = arith.mulf %40, %44 : vector<16x16xf32>
    %cst_12 = arith.constant dense<0.000000e+00> : vector<16x8xf32>
    %46 = tpu.matmul %45, %31, %cst_12 {dimension_numbers = #tpu.dot_dimension_numbers<[1], [0], [0], [1], [0, 0, 1, 1], [], []>} : vector<16x16xf32>, vector<16x8xf32>, vector<16x8xf32> -> vector<16x8xf32>
    %47 = vector.extract_strided_slice %10 {offsets = [0, 16], sizes = [16, 8], strides = [1, 1]} : vector<16x96xf32> to vector<16x8xf32>
    %48 = vector.extract_strided_slice %10 {offsets = [0, 48], sizes = [16, 8], strides = [1, 1]} : vector<16x96xf32> to vector<16x8xf32>
    %49 = vector.extract_strided_slice %10 {offsets = [0, 80], sizes = [16, 8], strides = [1, 1]} : vector<16x96xf32> to vector<16x8xf32>
    "tpu.trace_start"() <{level = 10 : i32, message = "qd,kd->qk"}> : () -> ()
    %cst_13 = arith.constant dense<0.000000e+00> : vector<16x16xf32>
    %50 = tpu.matmul %47, %48, %cst_13 {dimension_numbers = #tpu.dot_dimension_numbers<[1], [1], [0], [0], [0, 0, 1, 0], [], []>} : vector<16x8xf32>, vector<16x8xf32>, vector<16x16xf32> -> vector<16x16xf32>
    "tpu.trace_stop"() : () -> ()
    %cst_14 = arith.constant 0.353553385 : f32
    %51 = vector.broadcast %cst_14 : f32 to vector<16x16xf32>
    %52 = arith.mulf %50, %51 : vector<16x16xf32>
    %53 = arith.addf %52, %3 : vector<16x16xf32>
    %cst_15 = arith.constant dense<0xFF800000> : vector<16xf32>
    %54 = vector.multi_reduction <maximumf>, %53, %cst_15 [1] : vector<16x16xf32> to vector<16xf32>
    %55 = vector.shape_cast %54 : vector<16xf32> to vector<16x1xf32>
    %56 = vector.broadcast %55 : vector<16x1xf32> to vector<16x16xf32>
    %57 = arith.subf %53, %56 : vector<16x16xf32>
    %58 = math.exp %57 : vector<16x16xf32>
    %cst_16 = arith.constant dense<0.000000e+00> : vector<16xf32>
    %59 = vector.multi_reduction <add>, %58, %cst_16 [1] : vector<16x16xf32> to vector<16xf32>
    %60 = vector.shape_cast %59 : vector<16xf32> to vector<16x1xf32>
    %61 = tpu.reciprocal %60 {approx = true} : vector<16x1xf32> -> vector<16x1xf32>
    %62 = vector.broadcast %61 : vector<16x1xf32> to vector<16x16xf32>
    %63 = arith.mulf %58, %62 : vector<16x16xf32>
    %cst_17 = arith.constant dense<0.000000e+00> : vector<16x8xf32>
    %64 = tpu.matmul %63, %49, %cst_17 {dimension_numbers = #tpu.dot_dimension_numbers<[1], [0], [0], [1], [0, 0, 1, 1], [], []>} : vector<16x16xf32>, vector<16x8xf32>, vector<16x8xf32> -> vector<16x8xf32>
    %65 = vector.extract_strided_slice %10 {offsets = [0, 24], sizes = [16, 8], strides = [1, 1]} : vector<16x96xf32> to vector<16x8xf32>
    %66 = vector.extract_strided_slice %10 {offsets = [0, 56], sizes = [16, 8], strides = [1, 1]} : vector<16x96xf32> to vector<16x8xf32>
    %67 = vector.extract_strided_slice %10 {offsets = [0, 88], sizes = [16, 8], strides = [1, 1]} : vector<16x96xf32> to vector<16x8xf32>
    "tpu.trace_start"() <{level = 10 : i32, message = "qd,kd->qk"}> : () -> ()
    %cst_18 = arith.constant dense<0.000000e+00> : vector<16x16xf32>
    %68 = tpu.matmul %65, %66, %cst_18 {dimension_numbers = #tpu.dot_dimension_numbers<[1], [1], [0], [0], [0, 0, 1, 0], [], []>} : vector<16x8xf32>, vector<16x8xf32>, vector<16x16xf32> -> vector<16x16xf32>
    "tpu.trace_stop"() : () -> ()
    %cst_19 = arith.constant 0.353553385 : f32
    %69 = vector.broadcast %cst_19 : f32 to vector<16x16xf32>
    %70 = arith.mulf %68, %69 : vector<16x16xf32>
    %71 = arith.addf %70, %3 : vector<16x16xf32>
    %cst_20 = arith.constant dense<0xFF800000> : vector<16xf32>
    %72 = vector.multi_reduction <maximumf>, %71, %cst_20 [1] : vector<16x16xf32> to vector<16xf32>
    %73 = vector.shape_cast %72 : vector<16xf32> to vector<16x1xf32>
    %74 = vector.broadcast %73 : vector<16x1xf32> to vector<16x16xf32>
    %75 = arith.subf %71, %74 : vector<16x16xf32>
    %76 = math.exp %75 : vector<16x16xf32>
    %cst_21 = arith.constant dense<0.000000e+00> : vector<16xf32>
    %77 = vector.multi_reduction <add>, %76, %cst_21 [1] : vector<16x16xf32> to vector<16xf32>
    %78 = vector.shape_cast %77 : vector<16xf32> to vector<16x1xf32>
    %79 = tpu.reciprocal %78 {approx = true} : vector<16x1xf32> -> vector<16x1xf32>
    %80 = vector.broadcast %79 : vector<16x1xf32> to vector<16x16xf32>
    %81 = arith.mulf %76, %80 : vector<16x16xf32>
    %cst_22 = arith.constant dense<0.000000e+00> : vector<16x8xf32>
    %82 = tpu.matmul %81, %67, %cst_22 {dimension_numbers = #tpu.dot_dimension_numbers<[1], [0], [0], [1], [0, 0, 1, 1], [], []>} : vector<16x16xf32>, vector<16x8xf32>, vector<16x8xf32> -> vector<16x8xf32>
    %83 = tpu.concatenate %28, %46, %64, %82 in 1 : vector<16x8xf32>, vector<16x8xf32>, vector<16x8xf32>, vector<16x8xf32> -> vector<16x32xf32>
    %cst_23 = arith.constant dense<0.000000e+00> : vector<16x32xf32>
    %84 = tpu.matmul %83, %5, %cst_23 {dimension_numbers = #tpu.dot_dimension_numbers<[1], [0], [0], [1], [0, 0, 1, 1], [], []>} : vector<16x32xf32>, vector<32x32xf32>, vector<16x32xf32> -> vector<16x32xf32>
    %85 = vector.broadcast %7 : vector<1x32xf32> to vector<16x32xf32>
    %86 = arith.addf %84, %85 : vector<16x32xf32>
    %c0_24 = arith.constant 0 : index
    %c0_25 = arith.constant 0 : index
    %87 = vector.load %arg2[%c0_24, %c0_25] : memref<16x32xf32, #tpu.memory_space<vmem>>, vector<16x32xf32>
    tpu.vector_store %arg2[%c0_24, %c0_25], %86 {strides = array<i32>} : memref<16x32xf32, #tpu.memory_space<vmem>>, vector<16x32xf32>,
    return
  }
}

</mosaic_0001>

<llo_original>
// kernel: tpu_custom_call.1
$region0: #{tpu_custom_call.1}
  #allocation0 [shape = 'u32[]', space=smem, size = 0x4, offset = 0x4, fixed_abs, tag = 'smem constant byte address 0x4 - core index']
  #allocation1 [shape = 'u32[144,128]{1,0:T(1,128)}', space=vmem, size = 0x12000, scoped, tag = 'internal scratch']
  %s0 = inlined_call_operand.hbm [shape: f32[16,48], index: 0, kind: input, shape index: {}]
  %s1 = inlined_call_operand.hbm [shape: f32[33,128], index: 1, kind: input, shape index: {}]
  %s2 = inlined_call_operand.hbm [shape: f32[16,32], index: 2, kind: output, shape index: {}]
  %s3 = sld [smem:[#allocation0]]
  $region26: #{tpu_custom_call.1} parent=0
    _
  %s5 = ssub.s32 1, %s3
  %s6 = scalar_select 0, %s5, %s3
  $region1: #{tpu_custom_call.1} parent=0
    #allocation2 [shape = 'u8[8192]{0}', space=vmem, size = 0x2000, scoped, tag = 'input window, operand 0, single buffered']
    #allocation3 [shape = 's32[1]{0}', space=sflag, size = 0x4, scoped, tag = 'scoped memory for tpu_custom_call.1']
    #allocation4 [shape = 's32[1]{0}', space=sflag, size = 0x4, scoped, tag = 'scoped memory for tpu_custom_call.1']
    #allocation5 [shape = 'u8[20480]{0}', space=vmem, size = 0x5000, scoped, tag = 'input window, operand 1, single buffered']
    #allocation6 [shape = 's32[1]{0}', space=sflag, size = 0x4, scoped, tag = 'scoped memory for tpu_custom_call.1']
    #allocation7 [shape = 'u8[8192]{0}', space=vmem, size = 0x2000, scoped, tag = 'output window, operand 0, single buffered']
    %7 = vsyncpa [#allocation3], 0
    %8 = vsyncpa [#allocation6], 0
    %9 = vsyncpa [#allocation4], 0
    // Predicated region
    $region2: #{tpu_custom_call.1} parent=1 // pred_check
      _
    $region3: #{tpu_custom_call.1} parent=1 // pred_check_branch
      %11 = sbr.rel (0) target = $region5
    $region4: #{tpu_custom_call.1} parent=1 // pred_region
      %s13 = ssub.s32 256, 256
      %14 = vsyncadd [#allocation3], %s13
      %s15 = sshll.u32 [#allocation2], 4
      %s16 = int_to_ptr.vmem [resolvable:$true] %s15
      %21 = dma.hbm_to_vmem [thread:$0]  %s0, 256, %s16, [#allocation3], 128, 128, 8
    $region5: #{tpu_custom_call.1} parent=1 // pred_fallthru
      _
    // Predicated region
    $region6: #{tpu_custom_call.1} parent=1 // pred_check
      _
    $region7: #{tpu_custom_call.1} parent=1 // pred_check_branch
      %23 = sbr.rel (0) target = $region9
    $region8: #{tpu_custom_call.1} parent=1 // pred_region
      %s25 = ssub.s32 640, 640
      %26 = vsyncadd [#allocation6], %s25
      %s27 = sshll.u32 [#allocation5], 4
      %s28 = int_to_ptr.vmem [resolvable:$true] %s27
      %33 = dma.hbm_to_vmem [thread:$0]  %s1, 640, %s28, [#allocation6], 128, 128, 8
    $region9: #{tpu_custom_call.1} parent=1 // pred_fallthru
      _
    // Predicated region
    $region10: #{tpu_custom_call.1} parent=1 // pred_check
      _
    $region11: #{tpu_custom_call.1} parent=1 // pred_check_branch
      %35 = sbr.rel (0) target = $region13
    $region12: #{tpu_custom_call.1} parent=1 // pred_region
      %36 = dma.done [#allocation3], 256
    $region13: #{tpu_custom_call.1} parent=1 // pred_fallthru
      _
    // Predicated region
    $region14: #{tpu_custom_call.1} parent=1 // pred_check
      _
    $region15: #{tpu_custom_call.1} parent=1 // pred_check_branch
      %38 = sbr.rel (0) target = $region17
    $region16: #{tpu_custom_call.1} parent=1 // pred_region
      %39 = dma.done [#allocation6], 640
    $region17: #{tpu_custom_call.1} parent=1 // pred_fallthru
      _
    %v40 = vld [vmem:[#allocation2] sm:$0xff]
    %v41 = vld [vmem:[#allocation2 + $0x8] sm:$0xff]
    %v42 = vld [vmem:[#allocation5] sm:$0xff]
    %v43 = vld [vmem:[#allocation5 + $0x8] sm:$0xff]
    %v44 = vld [vmem:[#allocation5 + $0x10] sm:$0xff]
    %v45 = vld [vmem:[#allocation5 + $0x18] sm:$0xff]
    %v46 = vld [vmem:[#allocation5 + $0x20] sm:$0x1]
    %v47 = vlaneseq
    %v48 = vshrl.u32 %v47, 7
    %v49 = vsub.s32 0, %v48
    %v50 = vrot.slane %v46, %v49
    %vm51 = vcmask 261120
    %v53 = vsel %vm51, %v40, 0
    %v56 = vsel %vm51, %v41, 0
    %58 = vmatprep.subr.mxu0 0.0
    %59 = vmatpush1.msra.mxu0 %v42
    %60 = vmatprep.subr.mxu0 0.0
    %61 = vmatpush1.msra.mxu0 %v43
    %62 = vmatprep.subr.mxu0 0.0
    %63 = vmatpush1.msra.mxu0 %v44
    %64 = vmatprep.subr.mxu0 0.0
    %65 = vmatpush1.msra.mxu0 %v45
    %66 = vmatprep.subr.mxu0 0.0
    %67 = vmatpush1.msra.mxu0 0.0
    %68 = vmatprep.subr.mxu0 0.0
    %69 = vmatpush1.msra.mxu0 0.0
    %70 = vmatprep.subr.mxu0 0.0
    %71 = vmatpush1.msra.mxu0 0.0
    %72 = vmatprep.subr.mxu0 0.0
    %73 = vmatpush1.msra.mxu0 0.0
    %74 = vmatprep.subr.mxu0 0.0
    %75 = vmatpush1.msra.mxu0 0.0
    %76 = vmatprep.subr.mxu0 0.0
    %77 = vmatpush1.msra.mxu0 0.0
    %78 = vmatprep.subr.mxu0 0.0
    %79 = vmatpush1.msra.mxu0 0.0
    %80 = vmatprep.subr.mxu0 0.0
    %81 = vmatpush1.msra.mxu0 0.0
    %82 = vmatprep.subr.mxu0 0.0
    %83 = vmatpush1.msra.mxu0 0.0
    %84 = vmatprep.subr.mxu0 0.0
    %85 = vmatpush1.msra.mxu0 0.0
    %86 = vmatprep.subr.mxu0 0.0
    %87 = vmatpush1.msra.mxu0 0.0
    %88 = vmatprep.subr.mxu0 0.0
    %89 = vmatpush1.msra.mxu0 0.0
    %90 = vmatprep.subr.mxu0 0.0
    %91 = vmatpush1.msra.mxu0 0.0
    %92 = vmatprep.subr.mxu0 0.0
    %93 = vmatpush1.msra.mxu0 0.0
    %94 = vmatprep.subr.mxu0 0.0
    %95 = vmatpush1.msra.mxu0 0.0
    %96 = vmatprep.subr.mxu0 0.0
    %97 = vmatpush1.msra.mxu0 0.0
    %98 = vmatprep.subr.mxu0 0.0
    %99 = vmatpush1.msra.mxu0 0.0
    %100 = vmatprep.subr.mxu0 0.0
    %101 = vmatpush1.msra.mxu0 0.0
    %102 = vmatprep.subr.mxu0 0.0
    %103 = vmatpush1.msra.mxu0 0.0
    %104 = vmatprep.subr.mxu0 0.0
    %105 = vmatpush1.msra.mxu0 0.0
    %106 = vmatprep.subr.mxu0 0.0
    %107 = vmatpush1.msra.mxu0 0.0
    %108 = vmatprep.subr.mxu0 0.0
    %109 = vmatpush1.msra.mxu0 0.0
    %110 = vmatprep.subr.mxu0 0.0
    %111 = vmatpush1.msra.mxu0 0.0
    %112 = vmatprep.subr.mxu0 0.0
    %113 = vmatpush1.msra.mxu0 0.0
    %114 = vmatprep.subr.mxu0 0.0
    %115 = vmatpush1.msra.mxu0 0.0
    %116 = vmatprep.subr.mxu0 0.0
    %117 = vmatpush1.msra.mxu0 0.0
    %118 = vmatprep.subr.mxu0 0.0
    %119 = vmatpush1.msra.mxu0 0.0
    %120 = vmatprep.subr.mxu0 0.0
    %121 = vmatpush1.msra.mxu0 0.0
    %122 = vmatprep.mubr.f32.mxu0 0.0
    %123 = vmatmul.mubr.f32.gmra.mrb[0].mxu0 %v53
    %v124 = vpop.f32.mrb[0].mxu0
    %v125 = vadd.f32 %v50, %v124
    %v126 = vpop.f32.mrb[0].mxu0
    %127 = vmatprep.mubr.f32.mxu0 0.0
    %128 = vmatmul.mubr.f32.gmra.mrb[0].mxu0 %v56
    %v129 = vpop.f32.mrb[0].mxu0
    %v130 = vadd.f32 %v50, %v129
    %v131 = vpop.f32.mrb[0].mxu0
    %132 = vdwg.mxu0
    %135 = vrot.lane.b32.xlu0 %v125, 96
    %v136 = vpop.permute.xlu0 %135
    %137 = vrot.lane.b32.xlu0 %v130, 96
    %v138 = vpop.permute.xlu0 %137
    %vm139 = vcmask 64512
    %v140 = vsel %vm139, %v125, 0
    %v142 = vsel %vm139, %v130, 0
    %v144 = vsel %vm139, %v136, 0
    %v146 = vsel %vm139, %v138, 0
    %148 = vmatprep.subr.mxu0 0.0
    %149 = vmatpush1.xpose.msra.mxu0 %v144
    %150 = vmatprep.subr.mxu0 0.0
    %151 = vmatpush1.xpose.msra.mxu0 %v146
    %152 = vmatprep.subr.mxu0 0.0
    %153 = vmatpush1.xpose.msra.mxu0 0.0
    %154 = vmatprep.subr.mxu0 0.0
    %155 = vmatpush1.xpose.msra.mxu0 0.0
    %156 = vmatprep.subr.mxu0 0.0
    %157 = vmatpush1.xpose.msra.mxu0 0.0
    %158 = vmatprep.subr.mxu0 0.0
    %159 = vmatpush1.xpose.msra.mxu0 0.0
    %160 = vmatprep.subr.mxu0 0.0
    %161 = vmatpush1.xpose.msra.mxu0 0.0
    %162 = vmatprep.subr.mxu0 0.0
    %163 = vmatpush1.xpose.msra.mxu0 0.0
    %164 = vmatprep.subr.mxu0 0.0
    %165 = vmatpush1.xpose.msra.mxu0 0.0
    %166 = vmatprep.subr.mxu0 0.0
    %167 = vmatpush1.xpose.msra.mxu0 0.0
    %168 = vmatprep.subr.mxu0 0.0
    %169 = vmatpush1.xpose.msra.mxu0 0.0
    %170 = vmatprep.subr.mxu0 0.0
    %171 = vmatpush1.xpose.msra.mxu0 0.0
    %172 = vmatprep.subr.mxu0 0.0
    %173 = vmatpush1.xpose.msra.mxu0 0.0
    %174 = vmatprep.subr.mxu0 0.0
    %175 = vmatpush1.xpose.msra.mxu0 0.0
    %176 = vmatprep.subr.mxu0 0.0
    %177 = vmatpush1.xpose.msra.mxu0 0.0
    %178 = vmatprep.subr.mxu0 0.0
    %179 = vmatpush1.xpose.msra.mxu0 0.0
    %180 = vmatprep.subr.mxu0 0.0
    %181 = vmatpush1.xpose.msra.mxu0 0.0
    %182 = vmatprep.subr.mxu0 0.0
    %183 = vmatpush1.xpose.msra.mxu0 0.0
    %184 = vmatprep.subr.mxu0 0.0
    %185 = vmatpush1.xpose.msra.mxu0 0.0
    %186 = vmatprep.subr.mxu0 0.0
    %187 = vmatpush1.xpose.msra.mxu0 0.0
    %188 = vmatprep.subr.mxu0 0.0
    %189 = vmatpush1.xpose.msra.mxu0 0.0
    %190 = vmatprep.subr.mxu0 0.0
    %191 = vmatpush1.xpose.msra.mxu0 0.0
    %192 = vmatprep.subr.mxu0 0.0
    %193 = vmatpush1.xpose.msra.mxu0 0.0
    %194 = vmatprep.subr.mxu0 0.0
    %195 = vmatpush1.xpose.msra.mxu0 0.0
    %196 = vmatprep.subr.mxu0 0.0
    %197 = vmatpush1.xpose.msra.mxu0 0.0
    %198 = vmatprep.subr.mxu0 0.0
    %199 = vmatpush1.xpose.msra.mxu0 0.0
    %200 = vmatprep.subr.mxu0 0.0
    %201 = vmatpush1.xpose.msra.mxu0 0.0
    %202 = vmatprep.subr.mxu0 0.0
    %203 = vmatpush1.xpose.msra.mxu0 0.0
    %204 = vmatprep.subr.mxu0 0.0
    %205 = vmatpush1.xpose.msra.mxu0 0.0
    %206 = vmatprep.subr.mxu0 0.0
    %207 = vmatpush1.xpose.msra.mxu0 0.0
    %208 = vmatprep.subr.mxu0 0.0
    %209 = vmatpush1.xpose.msra.mxu0 0.0
    %210 = vmatprep.subr.mxu0 0.0
    %211 = vmatpush1.xpose.msra.mxu0 0.0
    %212 = vmatprep.mubr.f32.mxu0 0.0
    %213 = vmatmul.mubr.f32.gmra.mrb[0].mxu0 %v140
    %v214 = vpop.f32.mrb[0].mxu0
    %v215 = vadd.f32 0.0, %v214
    %v216 = vpop.f32.mrb[0].mxu0
    %217 = vmatprep.mubr.f32.mxu0 0.0
    %218 = vmatmul.mubr.f32.gmra.mrb[0].mxu0 %v142
    %v219 = vpop.f32.mrb[0].mxu0
    %v220 = vadd.f32 0.0, %v219
    %v221 = vpop.f32.mrb[0].mxu0
    %222 = vdwg.mxu0
    %v223 = vmul.f32 %v215, 0.35355338
    %v224 = vmul.f32 %v220, 0.35355338
    %225 = vrot.lane.b32.xlu0 %v40, 96
    %v226 = vpop.permute.xlu0 %225
    %227 = vrot.lane.b32.xlu0 %v41, 96
    %v228 = vpop.permute.xlu0 %227
    %v231 = vadd.f32 %v223, %v226
    %v232 = vadd.f32 %v224, %v228
    %vm233 = vcmask 130048
    %v234 = vsel %vm233, %v231, -inf
    %235 = vmax.xlane.f32.xlu0 %v234
    %v236 = vpop.xlane.xlu0 %235
    %v237 = vsel %vm233, %v232, -inf
    %238 = vmax.xlane.f32.xlu0 %v237
    %v239 = vpop.xlane.xlu0 %238
    %v240 = vsub.f32 %v231, %v236
    %v241 = vsub.f32 %v232, %v239
    %v242 = vmul.f32 %v240, 1.442695
    %v243 = vpow.pop %v242
    %v244 = vmul.f32 %v241, 1.442695
    %v245 = vpow.pop %v244
    %v246 = vsel %vm233, %v243, 0.0
    %247 = vadd.xlane.f32.xlu0 %v246
    %v248 = vpop.xlane.xlu0 %247
    %v249 = vsel %vm233, %v245, 0.0
    %250 = vadd.xlane.f32.xlu0 %v249
    %v251 = vpop.xlane.xlu0 %250
    %v252 = vrcp.pop %v248
    %v253 = vrcp.pop %v251
    %v254 = vmul.f32 %v243, %v252
    %v255 = vmul.f32 %v245, %v253
    %256 = vrot.lane.b32.xlu0 %v125, 64
    %v257 = vpop.permute.xlu0 %256
    %258 = vrot.lane.b32.xlu0 %v130, 64
    %v259 = vpop.permute.xlu0 %258
    %v263 = vsel %vm233, %v254, 0
    %v266 = vsel %vm233, %v255, 0
    %268 = vmatprep.subr.mxu0 0.0
    %269 = vmatpush1.msra.mxu0 %v257
    %270 = vmatprep.subr.mxu0 0.0
    %271 = vmatpush1.msra.mxu0 %v259
    %272 = vmatprep.subr.mxu0 0.0
    %273 = vmatpush1.msra.mxu0 0.0
    %274 = vmatprep.subr.mxu0 0.0
    %275 = vmatpush1.msra.mxu0 0.0
    %276 = vmatprep.subr.mxu0 0.0
    %277 = vmatpush1.msra.mxu0 0.0
    %278 = vmatprep.subr.mxu0 0.0
    %279 = vmatpush1.msra.mxu0 0.0
    %280 = vmatprep.subr.mxu0 0.0
    %281 = vmatpush1.msra.mxu0 0.0
    %282 = vmatprep.subr.mxu0 0.0
    %283 = vmatpush1.msra.mxu0 0.0
    %284 = vmatprep.subr.mxu0 0.0
    %285 = vmatpush1.msra.mxu0 0.0
    %286 = vmatprep.subr.mxu0 0.0
    %287 = vmatpush1.msra.mxu0 0.0
    %288 = vmatprep.subr.mxu0 0.0
    %289 = vmatpush1.msra.mxu0 0.0
    %290 = vmatprep.subr.mxu0 0.0
    %291 = vmatpush1.msra.mxu0 0.0
    %292 = vmatprep.subr.mxu0 0.0
    %293 = vmatpush1.msra.mxu0 0.0
    %294 = vmatprep.subr.mxu0 0.0
    %295 = vmatpush1.msra.mxu0 0.0
    %296 = vmatprep.subr.mxu0 0.0
    %297 = vmatpush1.msra.mxu0 0.0
    %298 = vmatprep.subr.mxu0 0.0
    %299 = vmatpush1.msra.mxu0 0.0
    %300 = vmatprep.subr.mxu0 0.0
    %301 = vmatpush1.msra.mxu0 0.0
    %302 = vmatprep.subr.mxu0 0.0
    %303 = vmatpush1.msra.mxu0 0.0
    %304 = vmatprep.subr.mxu0 0.0
    %305 = vmatpush1.msra.mxu0 0.0
    %306 = vmatprep.subr.mxu0 0.0
    %307 = vmatpush1.msra.mxu0 0.0
    %308 = vmatprep.subr.mxu0 0.0
    %309 = vmatpush1.msra.mxu0 0.0
    %310 = vmatprep.subr.mxu0 0.0
    %311 = vmatpush1.msra.mxu0 0.0
    %312 = vmatprep.subr.mxu0 0.0
    %313 = vmatpush1.msra.mxu0 0.0
    %314 = vmatprep.subr.mxu0 0.0
    %315 = vmatpush1.msra.mxu0 0.0
    %316 = vmatprep.subr.mxu0 0.0
    %317 = vmatpush1.msra.mxu0 0.0
    %318 = vmatprep.subr.mxu0 0.0
    %319 = vmatpush1.msra.mxu0 0.0
    %320 = vmatprep.subr.mxu0 0.0
    %321 = vmatpush1.msra.mxu0 0.0
    %322 = vmatprep.subr.mxu0 0.0
    %323 = vmatpush1.msra.mxu0 0.0
    %324 = vmatprep.subr.mxu0 0.0
    %325 = vmatpush1.msra.mxu0 0.0
    %326 = vmatprep.subr.mxu0 0.0
    %327 = vmatpush1.msra.mxu0 0.0
    %328 = vmatprep.subr.mxu0 0.0
    %329 = vmatpush1.msra.mxu0 0.0
    %330 = vmatprep.subr.mxu0 0.0
    %331 = vmatpush1.msra.mxu0 0.0
    %332 = vmatprep.mubr.f32.mxu0 0.0
    %333 = vmatmul.mubr.f32.gmra.mrb[0].mxu0 %v263
    %v334 = vpop.f32.mrb[0].mxu0
    %v335 = vadd.f32 0.0, %v334
    %v336 = vpop.f32.mrb[0].mxu0
    %337 = vmatprep.mubr.f32.mxu0 0.0
    %338 = vmatmul.mubr.f32.gmra.mrb[0].mxu0 %v266
    %v339 = vpop.f32.mrb[0].mxu0
    %v340 = vadd.f32 0.0, %v339
    %v341 = vpop.f32.mrb[0].mxu0
    %342 = vdwg.mxu0
    %343 = vrot.lane.b32.xlu0 %v125, 120
    %v344 = vpop.permute.xlu0 %343
    %345 = vrot.lane.b32.xlu0 %v130, 120
    %v346 = vpop.permute.xlu0 %345
    %347 = vrot.lane.b32.xlu0 %v125, 88
    %v348 = vpop.permute.xlu0 %347
    %349 = vrot.lane.b32.xlu0 %v130, 88
    %v350 = vpop.permute.xlu0 %349
    %v351 = vsel %vm139, %v344, 0
    %v353 = vsel %vm139, %v346, 0
    %v355 = vsel %vm139, %v348, 0
    %v357 = vsel %vm139, %v350, 0
    %359 = vmatprep.subr.mxu0 0.0
    %360 = vmatpush1.xpose.msra.mxu0 %v355
    %361 = vmatprep.subr.mxu0 0.0
    %362 = vmatpush1.xpose.msra.mxu0 %v357
    %363 = vmatprep.subr.mxu0 0.0
    %364 = vmatpush1.xpose.msra.mxu0 0.0
    %365 = vmatprep.subr.mxu0 0.0
    %366 = vmatpush1.xpose.msra.mxu0 0.0
    %367 = vmatprep.subr.mxu0 0.0
    %368 = vmatpush1.xpose.msra.mxu0 0.0
    %369 = vmatprep.subr.mxu0 0.0
    %370 = vmatpush1.xpose.msra.mxu0 0.0
    %371 = vmatprep.subr.mxu0 0.0
    %372 = vmatpush1.xpose.msra.mxu0 0.0
    %373 = vmatprep.subr.mxu0 0.0
    %374 = vmatpush1.xpose.msra.mxu0 0.0
    %375 = vmatprep.subr.mxu0 0.0
    %376 = vmatpush1.xpose.msra.mxu0 0.0
    %377 = vmatprep.subr.mxu0 0.0
    %378 = vmatpush1.xpose.msra.mxu0 0.0
    %379 = vmatprep.subr.mxu0 0.0
    %380 = vmatpush1.xpose.msra.mxu0 0.0
    %381 = vmatprep.subr.mxu0 0.0
    %382 = vmatpush1.xpose.msra.mxu0 0.0
    %383 = vmatprep.subr.mxu0 0.0
    %384 = vmatpush1.xpose.msra.mxu0 0.0
    %385 = vmatprep.subr.mxu0 0.0
    %386 = vmatpush1.xpose.msra.mxu0 0.0
    %387 = vmatprep.subr.mxu0 0.0
    %388 = vmatpush1.xpose.msra.mxu0 0.0
    %389 = vmatprep.subr.mxu0 0.0
    %390 = vmatpush1.xpose.msra.mxu0 0.0
    %391 = vmatprep.subr.mxu0 0.0
    %392 = vmatpush1.xpose.msra.mxu0 0.0
    %393 = vmatprep.subr.mxu0 0.0
    %394 = vmatpush1.xpose.msra.mxu0 0.0
    %395 = vmatprep.subr.mxu0 0.0
    %396 = vmatpush1.xpose.msra.mxu0 0.0
    %397 = vmatprep.subr.mxu0 0.0
    %398 = vmatpush1.xpose.msra.mxu0 0.0
    %399 = vmatprep.subr.mxu0 0.0
    %400 = vmatpush1.xpose.msra.mxu0 0.0
    %401 = vmatprep.subr.mxu0 0.0
    %402 = vmatpush1.xpose.msra.mxu0 0.0
    %403 = vmatprep.subr.mxu0 0.0
    %404 = vmatpush1.xpose.msra.mxu0 0.0
    %405 = vmatprep.subr.mxu0 0.0
    %406 = vmatpush1.xpose.msra.mxu0 0.0
    %407 = vmatprep.subr.mxu0 0.0
    %408 = vmatpush1.xpose.msra.mxu0 0.0
    %409 = vmatprep.subr.mxu0 0.0
    %410 = vmatpush1.xpose.msra.mxu0 0.0
    %411 = vmatprep.subr.mxu0 0.0
    %412 = vmatpush1.xpose.msra.mxu0 0.0
    %413 = vmatprep.subr.mxu0 0.0
    %414 = vmatpush1.xpose.msra.mxu0 0.0
    %415 = vmatprep.subr.mxu0 0.0
    %416 = vmatpush1.xpose.msra.mxu0 0.0
    %417 = vmatprep.subr.mxu0 0.0
    %418 = vmatpush1.xpose.msra.mxu0 0.0
    %419 = vmatprep.subr.mxu0 0.0
    %420 = vmatpush1.xpose.msra.mxu0 0.0
    %421 = vmatprep.subr.mxu0 0.0
    %422 = vmatpush1.xpose.msra.mxu0 0.0
    %423 = vmatprep.mubr.f32.mxu0 0.0
    %424 = vmatmul.mubr.f32.gmra.mrb[0].mxu0 %v351
    %v425 = vpop.f32.mrb[0].mxu0
    %v426 = vadd.f32 0.0, %v425
    %v427 = vpop.f32.mrb[0].mxu0
    %428 = vmatprep.mubr.f32.mxu0 0.0
    %429 = vmatmul.mubr.f32.gmra.mrb[0].mxu0 %v353
    %v430 = vpop.f32.mrb[0].mxu0
    %v431 = vadd.f32 0.0, %v430
    %v432 = vpop.f32.mrb[0].mxu0
    %433 = vdwg.mxu0
    %v434 = vmul.f32 %v426, 0.35355338
    %v435 = vmul.f32 %v431, 0.35355338
    %v436 = vadd.f32 %v434, %v226
    %v437 = vadd.f32 %v435, %v228
    %v438 = vsel %vm233, %v436, -inf
    %439 = vmax.xlane.f32.xlu0 %v438
    %v440 = vpop.xlane.xlu0 %439
    %v441 = vsel %vm233, %v437, -inf
    %442 = vmax.xlane.f32.xlu0 %v441
    %v443 = vpop.xlane.xlu0 %442
    %v444 = vsub.f32 %v436, %v440
    %v445 = vsub.f32 %v437, %v443
    %v446 = vmul.f32 %v444, 1.442695
    %v447 = vpow.pop %v446
    %v448 = vmul.f32 %v445, 1.442695
    %v449 = vpow.pop %v448
    %v450 = vsel %vm233, %v447, 0.0
    %451 = vadd.xlane.f32.xlu0 %v450
    %v452 = vpop.xlane.xlu0 %451
    %v453 = vsel %vm233, %v449, 0.0
    %454 = vadd.xlane.f32.xlu0 %v453
    %v455 = vpop.xlane.xlu0 %454
    %v456 = vrcp.pop %v452
    %v457 = vrcp.pop %v455
    %v458 = vmul.f32 %v447, %v456
    %v459 = vmul.f32 %v449, %v457
    %460 = vrot.lane.b32.xlu0 %v125, 56
    %v461 = vpop.permute.xlu0 %460
    %462 = vrot.lane.b32.xlu0 %v130, 56
    %v463 = vpop.permute.xlu0 %462
    %v467 = vsel %vm233, %v458, 0
    %v470 = vsel %vm233, %v459, 0
    %472 = vmatprep.subr.mxu0 0.0
    %473 = vmatpush1.msra.mxu0 %v461
    %474 = vmatprep.subr.mxu0 0.0
    %475 = vmatpush1.msra.mxu0 %v463
    %476 = vmatprep.subr.mxu0 0.0
    %477 = vmatpush1.msra.mxu0 0.0
    %478 = vmatprep.subr.mxu0 0.0
    %479 = vmatpush1.msra.mxu0 0.0
    %480 = vmatprep.subr.mxu0 0.0
    %481 = vmatpush1.msra.mxu0 0.0
    %482 = vmatprep.subr.mxu0 0.0
    %483 = vmatpush1.msra.mxu0 0.0
    %484 = vmatprep.subr.mxu0 0.0
    %485 = vmatpush1.msra.mxu0 0.0
    %486 = vmatprep.subr.mxu0 0.0
    %487 = vmatpush1.msra.mxu0 0.0
    %488 = vmatprep.subr.mxu0 0.0
    %489 = vmatpush1.msra.mxu0 0.0
    %490 = vmatprep.subr.mxu0 0.0
    %491 = vmatpush1.msra.mxu0 0.0
    %492 = vmatprep.subr.mxu0 0.0
    %493 = vmatpush1.msra.mxu0 0.0
    %494 = vmatprep.subr.mxu0 0.0
    %495 = vmatpush1.msra.mxu0 0.0
    %496 = vmatprep.subr.mxu0 0.0
    %497 = vmatpush1.msra.mxu0 0.0
    %498 = vmatprep.subr.mxu0 0.0
    %499 = vmatpush1.msra.mxu0 0.0
    %500 = vmatprep.subr.mxu0 0.0
    %501 = vmatpush1.msra.mxu0 0.0
    %502 = vmatprep.subr.mxu0 0.0
    %503 = vmatpush1.msra.mxu0 0.0
    %504 = vmatprep.subr.mxu0 0.0
    %505 = vmatpush1.msra.mxu0 0.0
    %506 = vmatprep.subr.mxu0 0.0
    %507 = vmatpush1.msra.mxu0 0.0
    %508 = vmatprep.subr.mxu0 0.0
    %509 = vmatpush1.msra.mxu0 0.0
    %510 = vmatprep.subr.mxu0 0.0
    %511 = vmatpush1.msra.mxu0 0.0
    %512 = vmatprep.subr.mxu0 0.0
    %513 = vmatpush1.msra.mxu0 0.0
    %514 = vmatprep.subr.mxu0 0.0
    %515 = vmatpush1.msra.mxu0 0.0
    %516 = vmatprep.subr.mxu0 0.0
    %517 = vmatpush1.msra.mxu0 0.0
    %518 = vmatprep.subr.mxu0 0.0
    %519 = vmatpush1.msra.mxu0 0.0
    %520 = vmatprep.subr.mxu0 0.0
    %521 = vmatpush1.msra.mxu0 0.0
    %522 = vmatprep.subr.mxu0 0.0
    %523 = vmatpush1.msra.mxu0 0.0
    %524 = vmatprep.subr.mxu0 0.0
    %525 = vmatpush1.msra.mxu0 0.0
    %526 = vmatprep.subr.mxu0 0.0
    %527 = vmatpush1.msra.mxu0 0.0
    %528 = vmatprep.subr.mxu0 0.0
    %529 = vmatpush1.msra.mxu0 0.0
    %530 = vmatprep.subr.mxu0 0.0
    %531 = vmatpush1.msra.mxu0 0.0
    %532 = vmatprep.subr.mxu0 0.0
    %533 = vmatpush1.msra.mxu0 0.0
    %534 = vmatprep.subr.mxu0 0.0
    %535 = vmatpush1.msra.mxu0 0.0
    %536 = vmatprep.mubr.f32.mxu0 0.0
    %537 = vmatmul.mubr.f32.gmra.mrb[0].mxu0 %v467
    %v538 = vpop.f32.mrb[0].mxu0
    %v539 = vadd.f32 0.0, %v538
    %v540 = vpop.f32.mrb[0].mxu0
    %541 = vmatprep.mubr.f32.mxu0 0.0
    %542 = vmatmul.mubr.f32.gmra.mrb[0].mxu0 %v470
    %v543 = vpop.f32.mrb[0].mxu0
    %v544 = vadd.f32 0.0, %v543
    %v545 = vpop.f32.mrb[0].mxu0
    %546 = vdwg.mxu0
    %547 = vrot.lane.b32.xlu0 %v125, 112
    %v548 = vpop.permute.xlu0 %547
    %549 = vrot.lane.b32.xlu0 %v130, 112
    %v550 = vpop.permute.xlu0 %549
    %551 = vrot.lane.b32.xlu0 %v125, 80
    %v552 = vpop.permute.xlu0 %551
    %553 = vrot.lane.b32.xlu0 %v130, 80
    %v554 = vpop.permute.xlu0 %553
    %v555 = vsel %vm139, %v548, 0
    %v557 = vsel %vm139, %v550, 0
    %v559 = vsel %vm139, %v552, 0
    %v561 = vsel %vm139, %v554, 0
    %563 = vmatprep.subr.mxu0 0.0
    %564 = vmatpush1.xpose.msra.mxu0 %v559
    %565 = vmatprep.subr.mxu0 0.0
    %566 = vmatpush1.xpose.msra.mxu0 %v561
    %567 = vmatprep.subr.mxu0 0.0
    %568 = vmatpush1.xpose.msra.mxu0 0.0
    %569 = vmatprep.subr.mxu0 0.0
    %570 = vmatpush1.xpose.msra.mxu0 0.0
    %571 = vmatprep.subr.mxu0 0.0
    %572 = vmatpush1.xpose.msra.mxu0 0.0
    %573 = vmatprep.subr.mxu0 0.0
    %574 = vmatpush1.xpose.msra.mxu0 0.0
    %575 = vmatprep.subr.mxu0 0.0
    %576 = vmatpush1.xpose.msra.mxu0 0.0
    %577 = vmatprep.subr.mxu0 0.0
    %578 = vmatpush1.xpose.msra.mxu0 0.0
    %579 = vmatprep.subr.mxu0 0.0
    %580 = vmatpush1.xpose.msra.mxu0 0.0
    %581 = vmatprep.subr.mxu0 0.0
    %582 = vmatpush1.xpose.msra.mxu0 0.0
    %583 = vmatprep.subr.mxu0 0.0
    %584 = vmatpush1.xpose.msra.mxu0 0.0
    %585 = vmatprep.subr.mxu0 0.0
    %586 = vmatpush1.xpose.msra.mxu0 0.0
    %587 = vmatprep.subr.mxu0 0.0
    %588 = vmatpush1.xpose.msra.mxu0 0.0
    %589 = vmatprep.subr.mxu0 0.0
    %590 = vmatpush1.xpose.msra.mxu0 0.0
    %591 = vmatprep.subr.mxu0 0.0
    %592 = vmatpush1.xpose.msra.mxu0 0.0
    %593 = vmatprep.subr.mxu0 0.0
    %594 = vmatpush1.xpose.msra.mxu0 0.0
    %595 = vmatprep.subr.mxu0 0.0
    %596 = vmatpush1.xpose.msra.mxu0 0.0
    %597 = vmatprep.subr.mxu0 0.0
    %598 = vmatpush1.xpose.msra.mxu0 0.0
    %599 = vmatprep.subr.mxu0 0.0
    %600 = vmatpush1.xpose.msra.mxu0 0.0
    %601 = vmatprep.subr.mxu0 0.0
    %602 = vmatpush1.xpose.msra.mxu0 0.0
    %603 = vmatprep.subr.mxu0 0.0
    %604 = vmatpush1.xpose.msra.mxu0 0.0
    %605 = vmatprep.subr.mxu0 0.0
    %606 = vmatpush1.xpose.msra.mxu0 0.0
    %607 = vmatprep.subr.mxu0 0.0
    %608 = vmatpush1.xpose.msra.mxu0 0.0
    %609 = vmatprep.subr.mxu0 0.0
    %610 = vmatpush1.xpose.msra.mxu0 0.0
    %611 = vmatprep.subr.mxu0 0.0
    %612 = vmatpush1.xpose.msra.mxu0 0.0
    %613 = vmatprep.subr.mxu0 0.0
    %614 = vmatpush1.xpose.msra.mxu0 0.0
    %615 = vmatprep.subr.mxu0 0.0
    %616 = vmatpush1.xpose.msra.mxu0 0.0
    %617 = vmatprep.subr.mxu0 0.0
    %618 = vmatpush1.xpose.msra.mxu0 0.0
    %619 = vmatprep.subr.mxu0 0.0
    %620 = vmatpush1.xpose.msra.mxu0 0.0
    %621 = vmatprep.subr.mxu0 0.0
    %622 = vmatpush1.xpose.msra.mxu0 0.0
    %623 = vmatprep.subr.mxu0 0.0
    %624 = vmatpush1.xpose.msra.mxu0 0.0
    %625 = vmatprep.subr.mxu0 0.0
    %626 = vmatpush1.xpose.msra.mxu0 0.0
    %627 = vmatprep.mubr.f32.mxu0 0.0
    %628 = vmatmul.mubr.f32.gmra.mrb[0].mxu0 %v555
    %v629 = vpop.f32.mrb[0].mxu0
    %v630 = vadd.f32 0.0, %v629
    %v631 = vpop.f32.mrb[0].mxu0
    %632 = vmatprep.mubr.f32.mxu0 0.0
    %633 = vmatmul.mubr.f32.gmra.mrb[0].mxu0 %v557
    %v634 = vpop.f32.mrb[0].mxu0
    %v635 = vadd.f32 0.0, %v634
    %v636 = vpop.f32.mrb[0].mxu0
    %637 = vdwg.mxu0
    %v638 = vmul.f32 %v630, 0.35355338
    %v639 = vmul.f32 %v635, 0.35355338
    %v640 = vadd.f32 %v638, %v226
    %v641 = vadd.f32 %v639, %v228
    %v642 = vsel %vm233, %v640, -inf
    %643 = vmax.xlane.f32.xlu0 %v642
    %v644 = vpop.xlane.xlu0 %643
    %v645 = vsel %vm233, %v641, -inf
    %646 = vmax.xlane.f32.xlu0 %v645
    %v647 = vpop.xlane.xlu0 %646
    %v648 = vsub.f32 %v640, %v644
    %v649 = vsub.f32 %v641, %v647
    %v650 = vmul.f32 %v648, 1.442695
    %v651 = vpow.pop %v650
    %v652 = vmul.f32 %v649, 1.442695
    %v653 = vpow.pop %v652
    %v654 = vsel %vm233, %v651, 0.0
    %655 = vadd.xlane.f32.xlu0 %v654
    %v656 = vpop.xlane.xlu0 %655
    %v657 = vsel %vm233, %v653, 0.0
    %658 = vadd.xlane.f32.xlu0 %v657
    %v659 = vpop.xlane.xlu0 %658
    %v660 = vrcp.pop %v656
    %v661 = vrcp.pop %v659
    %v662 = vmul.f32 %v651, %v660
    %v663 = vmul.f32 %v653, %v661
    %664 = vrot.lane.b32.xlu0 %v125, 48
    %v665 = vpop.permute.xlu0 %664
    %666 = vrot.lane.b32.xlu0 %v130, 48
    %v667 = vpop.permute.xlu0 %666
    %v671 = vsel %vm233, %v662, 0
    %v674 = vsel %vm233, %v663, 0
    %676 = vmatprep.subr.mxu0 0.0
    %677 = vmatpush1.msra.mxu0 %v665
    %678 = vmatprep.subr.mxu0 0.0
    %679 = vmatpush1.msra.mxu0 %v667
    %680 = vmatprep.subr.mxu0 0.0
    %681 = vmatpush1.msra.mxu0 0.0
    %682 = vmatprep.subr.mxu0 0.0
    %683 = vmatpush1.msra.mxu0 0.0
    %684 = vmatprep.subr.mxu0 0.0
    %685 = vmatpush1.msra.mxu0 0.0
    %686 = vmatprep.subr.mxu0 0.0
    %687 = vmatpush1.msra.mxu0 0.0
    %688 = vmatprep.subr.mxu0 0.0
    %689 = vmatpush1.msra.mxu0 0.0
    %690 = vmatprep.subr.mxu0 0.0
    %691 = vmatpush1.msra.mxu0 0.0
    %692 = vmatprep.subr.mxu0 0.0
    %693 = vmatpush1.msra.mxu0 0.0
    %694 = vmatprep.subr.mxu0 0.0
    %695 = vmatpush1.msra.mxu0 0.0
    %696 = vmatprep.subr.mxu0 0.0
    %697 = vmatpush1.msra.mxu0 0.0
    %698 = vmatprep.subr.mxu0 0.0
    %699 = vmatpush1.msra.mxu0 0.0
    %700 = vmatprep.subr.mxu0 0.0
    %701 = vmatpush1.msra.mxu0 0.0
    %702 = vmatprep.subr.mxu0 0.0
    %703 = vmatpush1.msra.mxu0 0.0
    %704 = vmatprep.subr.mxu0 0.0
    %705 = vmatpush1.msra.mxu0 0.0
    %706 = vmatprep.subr.mxu0 0.0
    %707 = vmatpush1.msra.mxu0 0.0
    %708 = vmatprep.subr.mxu0 0.0
    %709 = vmatpush1.msra.mxu0 0.0
    %710 = vmatprep.subr.mxu0 0.0
    %711 = vmatpush1.msra.mxu0 0.0
    %712 = vmatprep.subr.mxu0 0.0
    %713 = vmatpush1.msra.mxu0 0.0
    %714 = vmatprep.subr.mxu0 0.0
    %715 = vmatpush1.msra.mxu0 0.0
    %716 = vmatprep.subr.mxu0 0.0
    %717 = vmatpush1.msra.mxu0 0.0
    %718 = vmatprep.subr.mxu0 0.0
    %719 = vmatpush1.msra.mxu0 0.0
    %720 = vmatprep.subr.mxu0 0.0
    %721 = vmatpush1.msra.mxu0 0.0
    %722 = vmatprep.subr.mxu0 0.0
    %723 = vmatpush1.msra.mxu0 0.0
    %724 = vmatprep.subr.mxu0 0.0
    %725 = vmatpush1.msra.mxu0 0.0
    %726 = vmatprep.subr.mxu0 0.0
    %727 = vmatpush1.msra.mxu0 0.0
    %728 = vmatprep.subr.mxu0 0.0
    %729 = vmatpush1.msra.mxu0 0.0
    %730 = vmatprep.subr.mxu0 0.0
    %731 = vmatpush1.msra.mxu0 0.0
    %732 = vmatprep.subr.mxu0 0.0
    %733 = vmatpush1.msra.mxu0 0.0
    %734 = vmatprep.subr.mxu0 0.0
    %735 = vmatpush1.msra.mxu0 0.0
    %736 = vmatprep.subr.mxu0 0.0
    %737 = vmatpush1.msra.mxu0 0.0
    %738 = vmatprep.subr.mxu0 0.0
    %739 = vmatpush1.msra.mxu0 0.0
    %740 = vmatprep.mubr.f32.mxu0 0.0
    %741 = vmatmul.mubr.f32.gmra.mrb[0].mxu0 %v671
    %v742 = vpop.f32.mrb[0].mxu0
    %v743 = vadd.f32 0.0, %v742
    %v744 = vpop.f32.mrb[0].mxu0
    %745 = vmatprep.mubr.f32.mxu0 0.0
    %746 = vmatmul.mubr.f32.gmra.mrb[0].mxu0 %v674
    %v747 = vpop.f32.mrb[0].mxu0
    %v748 = vadd.f32 0.0, %v747
    %v749 = vpop.f32.mrb[0].mxu0
    %750 = vdwg.mxu0
    %751 = vrot.lane.b32.xlu0 %v125, 104
    %v752 = vpop.permute.xlu0 %751
    %753 = vrot.lane.b32.xlu0 %v130, 104
    %v754 = vpop.permute.xlu0 %753
    %755 = vrot.lane.b32.xlu0 %v125, 72
    %v756 = vpop.permute.xlu0 %755
    %757 = vrot.lane.b32.xlu0 %v130, 72
    %v758 = vpop.permute.xlu0 %757
    %v759 = vsel %vm139, %v752, 0
    %v761 = vsel %vm139, %v754, 0
    %v763 = vsel %vm139, %v756, 0
    %v765 = vsel %vm139, %v758, 0
    %767 = vmatprep.subr.mxu0 0.0
    %768 = vmatpush1.xpose.msra.mxu0 %v763
    %769 = vmatprep.subr.mxu0 0.0
    %770 = vmatpush1.xpose.msra.mxu0 %v765
    %771 = vmatprep.subr.mxu0 0.0
    %772 = vmatpush1.xpose.msra.mxu0 0.0
    %773 = vmatprep.subr.mxu0 0.0
    %774 = vmatpush1.xpose.msra.mxu0 0.0
    %775 = vmatprep.subr.mxu0 0.0
    %776 = vmatpush1.xpose.msra.mxu0 0.0
    %777 = vmatprep.subr.mxu0 0.0
    %778 = vmatpush1.xpose.msra.mxu0 0.0
    %779 = vmatprep.subr.mxu0 0.0
    %780 = vmatpush1.xpose.msra.mxu0 0.0
    %781 = vmatprep.subr.mxu0 0.0
    %782 = vmatpush1.xpose.msra.mxu0 0.0
    %783 = vmatprep.subr.mxu0 0.0
    %784 = vmatpush1.xpose.msra.mxu0 0.0
    %785 = vmatprep.subr.mxu0 0.0
    %786 = vmatpush1.xpose.msra.mxu0 0.0
    %787 = vmatprep.subr.mxu0 0.0
    %788 = vmatpush1.xpose.msra.mxu0 0.0
    %789 = vmatprep.subr.mxu0 0.0
    %790 = vmatpush1.xpose.msra.mxu0 0.0
    %791 = vmatprep.subr.mxu0 0.0
    %792 = vmatpush1.xpose.msra.mxu0 0.0
    %793 = vmatprep.subr.mxu0 0.0
    %794 = vmatpush1.xpose.msra.mxu0 0.0
    %795 = vmatprep.subr.mxu0 0.0
    %796 = vmatpush1.xpose.msra.mxu0 0.0
    %797 = vmatprep.subr.mxu0 0.0
    %798 = vmatpush1.xpose.msra.mxu0 0.0
    %799 = vmatprep.subr.mxu0 0.0
    %800 = vmatpush1.xpose.msra.mxu0 0.0
    %801 = vmatprep.subr.mxu0 0.0
    %802 = vmatpush1.xpose.msra.mxu0 0.0
    %803 = vmatprep.subr.mxu0 0.0
    %804 = vmatpush1.xpose.msra.mxu0 0.0
    %805 = vmatprep.subr.mxu0 0.0
    %806 = vmatpush1.xpose.msra.mxu0 0.0
    %807 = vmatprep.subr.mxu0 0.0
    %808 = vmatpush1.xpose.msra.mxu0 0.0
    %809 = vmatprep.subr.mxu0 0.0
    %810 = vmatpush1.xpose.msra.mxu0 0.0
    %811 = vmatprep.subr.mxu0 0.0
    %812 = vmatpush1.xpose.msra.mxu0 0.0
    %813 = vmatprep.subr.mxu0 0.0
    %814 = vmatpush1.xpose.msra.mxu0 0.0
    %815 = vmatprep.subr.mxu0 0.0
    %816 = vmatpush1.xpose.msra.mxu0 0.0
    %817 = vmatprep.subr.mxu0 0.0
    %818 = vmatpush1.xpose.msra.mxu0 0.0
    %819 = vmatprep.subr.mxu0 0.0
    %820 = vmatpush1.xpose.msra.mxu0 0.0
    %821 = vmatprep.subr.mxu0 0.0
    %822 = vmatpush1.xpose.msra.mxu0 0.0
    %823 = vmatprep.subr.mxu0 0.0
    %824 = vmatpush1.xpose.msra.mxu0 0.0
    %825 = vmatprep.subr.mxu0 0.0
    %826 = vmatpush1.xpose.msra.mxu0 0.0
    %827 = vmatprep.subr.mxu0 0.0
    %828 = vmatpush1.xpose.msra.mxu0 0.0
    %829 = vmatprep.subr.mxu0 0.0
    %830 = vmatpush1.xpose.msra.mxu0 0.0
    %831 = vmatprep.mubr.f32.mxu0 0.0
    %832 = vmatmul.mubr.f32.gmra.mrb[0].mxu0 %v759
    %v833 = vpop.f32.mrb[0].mxu0
    %v834 = vadd.f32 0.0, %v833
    %v835 = vpop.f32.mrb[0].mxu0
    %836 = vmatprep.mubr.f32.mxu0 0.0
    %837 = vmatmul.mubr.f32.gmra.mrb[0].mxu0 %v761
    %v838 = vpop.f32.mrb[0].mxu0
    %v839 = vadd.f32 0.0, %v838
    %v840 = vpop.f32.mrb[0].mxu0
    %841 = vdwg.mxu0
    %v842 = vmul.f32 %v834, 0.35355338
    %v843 = vmul.f32 %v839, 0.35355338
    %v844 = vadd.f32 %v842, %v226
    %v845 = vadd.f32 %v843, %v228
    %v846 = vsel %vm233, %v844, -inf
    %847 = vmax.xlane.f32.xlu0 %v846
    %v848 = vpop.xlane.xlu0 %847
    %v849 = vsel %vm233, %v845, -inf
    %850 = vmax.xlane.f32.xlu0 %v849
    %v851 = vpop.xlane.xlu0 %850
    %v852 = vsub.f32 %v844, %v848
    %v853 = vsub.f32 %v845, %v851
    %v854 = vmul.f32 %v852, 1.442695
    %v855 = vpow.pop %v854
    %v856 = vmul.f32 %v853, 1.442695
    %v857 = vpow.pop %v856
    %v858 = vsel %vm233, %v855, 0.0
    %859 = vadd.xlane.f32.xlu0 %v858
    %v860 = vpop.xlane.xlu0 %859
    %v861 = vsel %vm233, %v857, 0.0
    %862 = vadd.xlane.f32.xlu0 %v861
    %v863 = vpop.xlane.xlu0 %862
    %v864 = vrcp.pop %v860
    %v865 = vrcp.pop %v863
    %v866 = vmul.f32 %v855, %v864
    %v867 = vmul.f32 %v857, %v865
    %868 = vrot.lane.b32.xlu0 %v125, 40
    %v869 = vpop.permute.xlu0 %868
    %870 = vrot.lane.b32.xlu0 %v130, 40
    %v871 = vpop.permute.xlu0 %870
    %v875 = vsel %vm233, %v866, 0
    %v878 = vsel %vm233, %v867, 0
    %880 = vmatprep.subr.mxu0 0.0
    %881 = vmatpush1.msra.mxu0 %v869
    %882 = vmatprep.subr.mxu0 0.0
    %883 = vmatpush1.msra.mxu0 %v871
    %884 = vmatprep.subr.mxu0 0.0
    %885 = vmatpush1.msra.mxu0 0.0
    %886 = vmatprep.subr.mxu0 0.0
    %887 = vmatpush1.msra.mxu0 0.0
    %888 = vmatprep.subr.mxu0 0.0
    %889 = vmatpush1.msra.mxu0 0.0
    %890 = vmatprep.subr.mxu0 0.0
    %891 = vmatpush1.msra.mxu0 0.0
    %892 = vmatprep.subr.mxu0 0.0
    %893 = vmatpush1.msra.mxu0 0.0
    %894 = vmatprep.subr.mxu0 0.0
    %895 = vmatpush1.msra.mxu0 0.0
    %896 = vmatprep.subr.mxu0 0.0
    %897 = vmatpush1.msra.mxu0 0.0
    %898 = vmatprep.subr.mxu0 0.0
    %899 = vmatpush1.msra.mxu0 0.0
    %900 = vmatprep.subr.mxu0 0.0
    %901 = vmatpush1.msra.mxu0 0.0
    %902 = vmatprep.subr.mxu0 0.0
    %903 = vmatpush1.msra.mxu0 0.0
    %904 = vmatprep.subr.mxu0 0.0
    %905 = vmatpush1.msra.mxu0 0.0
    %906 = vmatprep.subr.mxu0 0.0
    %907 = vmatpush1.msra.mxu0 0.0
    %908 = vmatprep.subr.mxu0 0.0
    %909 = vmatpush1.msra.mxu0 0.0
    %910 = vmatprep.subr.mxu0 0.0
    %911 = vmatpush1.msra.mxu0 0.0
    %912 = vmatprep.subr.mxu0 0.0
    %913 = vmatpush1.msra.mxu0 0.0
    %914 = vmatprep.subr.mxu0 0.0
    %915 = vmatpush1.msra.mxu0 0.0
    %916 = vmatprep.subr.mxu0 0.0
    %917 = vmatpush1.msra.mxu0 0.0
    %918 = vmatprep.subr.mxu0 0.0
    %919 = vmatpush1.msra.mxu0 0.0
    %920 = vmatprep.subr.mxu0 0.0
    %921 = vmatpush1.msra.mxu0 0.0
    %922 = vmatprep.subr.mxu0 0.0
    %923 = vmatpush1.msra.mxu0 0.0
    %924 = vmatprep.subr.mxu0 0.0
    %925 = vmatpush1.msra.mxu0 0.0
    %926 = vmatprep.subr.mxu0 0.0
    %927 = vmatpush1.msra.mxu0 0.0
    %928 = vmatprep.subr.mxu0 0.0
    %929 = vmatpush1.msra.mxu0 0.0
    %930 = vmatprep.subr.mxu0 0.0
    %931 = vmatpush1.msra.mxu0 0.0
    %932 = vmatprep.subr.mxu0 0.0
    %933 = vmatpush1.msra.mxu0 0.0
    %934 = vmatprep.subr.mxu0 0.0
    %935 = vmatpush1.msra.mxu0 0.0
    %936 = vmatprep.subr.mxu0 0.0
    %937 = vmatpush1.msra.mxu0 0.0
    %938 = vmatprep.subr.mxu0 0.0
    %939 = vmatpush1.msra.mxu0 0.0
    %940 = vmatprep.subr.mxu0 0.0
    %941 = vmatpush1.msra.mxu0 0.0
    %942 = vmatprep.subr.mxu0 0.0
    %943 = vmatpush1.msra.mxu0 0.0
    %944 = vmatprep.mubr.f32.mxu0 0.0
    %945 = vmatmul.mubr.f32.gmra.mrb[0].mxu0 %v875
    %v946 = vpop.f32.mrb[0].mxu0
    %v947 = vadd.f32 0.0, %v946
    %v948 = vpop.f32.mrb[0].mxu0
    %949 = vmatprep.mubr.f32.mxu0 0.0
    %950 = vmatmul.mubr.f32.gmra.mrb[0].mxu0 %v878
    %v951 = vpop.f32.mrb[0].mxu0
    %v952 = vadd.f32 0.0, %v951
    %v953 = vpop.f32.mrb[0].mxu0
    %954 = vdwg.mxu0
    %957 = vrot.lane.b32.xlu0 %v539, 8
    %v958 = vpop.permute.xlu0 %957
    %959 = vrot.lane.b32.xlu0 %v544, 8
    %v960 = vpop.permute.xlu0 %959
    %965 = vrot.lane.b32.xlu0 %v743, 16
    %v966 = vpop.permute.xlu0 %965
    %967 = vrot.lane.b32.xlu0 %v748, 16
    %v968 = vpop.permute.xlu0 %967
    %973 = vrot.lane.b32.xlu0 %v947, 24
    %v974 = vpop.permute.xlu0 %973
    %975 = vrot.lane.b32.xlu0 %v952, 24
    %v976 = vpop.permute.xlu0 %975
    %v979 = vsel %vm139, %v335, %v958
    %v980 = vsel %vm139, %v340, %v960
    %v981 = vsel %vm233, %v979, %v966
    %v982 = vsel %vm233, %v980, %v968
    %vm983 = vcmask 195584
    %v984 = vsel %vm983, %v981, %v974
    %v985 = vsel %vm983, %v982, %v976
    %990 = vrot.lane.b32.xlu0 %v42, 32
    %v991 = vpop.permute.xlu0 %990
    %992 = vrot.lane.b32.xlu0 %v43, 32
    %v993 = vpop.permute.xlu0 %992
    %994 = vrot.lane.b32.xlu0 %v44, 32
    %v995 = vpop.permute.xlu0 %994
    %996 = vrot.lane.b32.xlu0 %v45, 32
    %v997 = vpop.permute.xlu0 %996
    %1003 = vrot.lane.b32.xlu0 %v50, 32
    %v1004 = vpop.permute.xlu0 %1003
    %v1007 = vsel %vm51, %v984, 0
    %v1010 = vsel %vm51, %v985, 0
    %1012 = vmatprep.subr.mxu0 0.0
    %1013 = vmatpush1.msra.mxu0 %v991
    %1014 = vmatprep.subr.mxu0 0.0
    %1015 = vmatpush1.msra.mxu0 %v993
    %1016 = vmatprep.subr.mxu0 0.0
    %1017 = vmatpush1.msra.mxu0 %v995
    %1018 = vmatprep.subr.mxu0 0.0
    %1019 = vmatpush1.msra.mxu0 %v997
    %1020 = vmatprep.subr.mxu0 0.0
    %1021 = vmatpush1.msra.mxu0 0.0
    %1022 = vmatprep.subr.mxu0 0.0
    %1023 = vmatpush1.msra.mxu0 0.0
    %1024 = vmatprep.subr.mxu0 0.0
    %1025 = vmatpush1.msra.mxu0 0.0
    %1026 = vmatprep.subr.mxu0 0.0
    %1027 = vmatpush1.msra.mxu0 0.0
    %1028 = vmatprep.subr.mxu0 0.0
    %1029 = vmatpush1.msra.mxu0 0.0
    %1030 = vmatprep.subr.mxu0 0.0
    %1031 = vmatpush1.msra.mxu0 0.0
    %1032 = vmatprep.subr.mxu0 0.0
    %1033 = vmatpush1.msra.mxu0 0.0
    %1034 = vmatprep.subr.mxu0 0.0
    %1035 = vmatpush1.msra.mxu0 0.0
    %1036 = vmatprep.subr.mxu0 0.0
    %1037 = vmatpush1.msra.mxu0 0.0
    %1038 = vmatprep.subr.mxu0 0.0
    %1039 = vmatpush1.msra.mxu0 0.0
    %1040 = vmatprep.subr.mxu0 0.0
    %1041 = vmatpush1.msra.mxu0 0.0
    %1042 = vmatprep.subr.mxu0 0.0
    %1043 = vmatpush1.msra.mxu0 0.0
    %1044 = vmatprep.subr.mxu0 0.0
    %1045 = vmatpush1.msra.mxu0 0.0
    %1046 = vmatprep.subr.mxu0 0.0
    %1047 = vmatpush1.msra.mxu0 0.0
    %1048 = vmatprep.subr.mxu0 0.0
    %1049 = vmatpush1.msra.mxu0 0.0
    %1050 = vmatprep.subr.mxu0 0.0
    %1051 = vmatpush1.msra.mxu0 0.0
    %1052 = vmatprep.subr.mxu0 0.0
    %1053 = vmatpush1.msra.mxu0 0.0
    %1054 = vmatprep.subr.mxu0 0.0
    %1055 = vmatpush1.msra.mxu0 0.0
    %1056 = vmatprep.subr.mxu0 0.0
    %1057 = vmatpush1.msra.mxu0 0.0
    %1058 = vmatprep.subr.mxu0 0.0
    %1059 = vmatpush1.msra.mxu0 0.0
    %1060 = vmatprep.subr.mxu0 0.0
    %1061 = vmatpush1.msra.mxu0 0.0
    %1062 = vmatprep.subr.mxu0 0.0
    %1063 = vmatpush1.msra.mxu0 0.0
    %1064 = vmatprep.subr.mxu0 0.0
    %1065 = vmatpush1.msra.mxu0 0.0
    %1066 = vmatprep.subr.mxu0 0.0
    %1067 = vmatpush1.msra.mxu0 0.0
    %1068 = vmatprep.subr.mxu0 0.0
    %1069 = vmatpush1.msra.mxu0 0.0
    %1070 = vmatprep.subr.mxu0 0.0
    %1071 = vmatpush1.msra.mxu0 0.0
    %1072 = vmatprep.subr.mxu0 0.0
    %1073 = vmatpush1.msra.mxu0 0.0
    %1074 = vmatprep.subr.mxu0 0.0
    %1075 = vmatpush1.msra.mxu0 0.0
    %1076 = vmatprep.mubr.f32.mxu0 0.0
    %1077 = vmatmul.mubr.f32.gmra.mrb[0].mxu0 %v1007
    %v1078 = vpop.f32.mrb[0].mxu0
    %v1079 = vadd.f32 %v1004, %v1078
    %v1080 = vpop.f32.mrb[0].mxu0
    %1081 = vmatprep.mubr.f32.mxu0 0.0
    %1082 = vmatmul.mubr.f32.gmra.mrb[0].mxu0 %v1010
    %v1083 = vpop.f32.mrb[0].mxu0
    %v1084 = vadd.f32 %v1004, %v1083
    %v1085 = vpop.f32.mrb[0].mxu0
    %1086 = vdwg.mxu0
    %1087 = vst.msk [vmem:[#allocation7] sm:$0xff] %vm51, %v1079
    %1088 = vst.msk [vmem:[#allocation7 + $0x8] sm:$0xff] %vm51, %v1084
    // Predicated region
    $region18: #{tpu_custom_call.1} parent=1 // pred_check
      _
    $region19: #{tpu_custom_call.1} parent=1 // pred_check_branch
      %1090 = sbr.rel (0) target = $region21
    $region20: #{tpu_custom_call.1} parent=1 // pred_region
      %s1092 = ssub.s32 256, 256
      %1093 = vsyncadd [#allocation4], %s1092
      %s1094 = sshll.u32 [#allocation7], 4
      %s1095 = int_to_ptr.vmem [resolvable:$true] %s1094
      %1100 = dma.vmem_to_hbm [thread:$0]  %s1095, 256, %s2, [#allocation4], 128, 128, 8
    $region21: #{tpu_custom_call.1} parent=1 // pred_fallthru
      _
    // Predicated region
    $region22: #{tpu_custom_call.1} parent=1 // pred_check
      _
    $region23: #{tpu_custom_call.1} parent=1 // pred_check_branch
      %1102 = sbr.rel (0) target = $region25
    $region24: #{tpu_custom_call.1} parent=1 // pred_region
      %1103 = dma.done [#allocation4], 256
    $region25: #{tpu_custom_call.1} parent=1 // pred_fallthru
      _
    %1104 = vsyncpa [#allocation3], 1
    %1105 = vsyncpa [#allocation6], 1
    %1106 = vsyncpa [#allocation4], 1

</llo_original>
